<compile_context>
chip_gen: v7x
topology: tpu7x:2x2x1
jax: 0.10.0
libtpu: 0.0.40
codegen_flags: <defaults>
</compile_context>

<pallas_src>
import functools

import numpy as np
import jax
import jax.numpy as jnp
from jax.experimental import pallas as pl
from jax.experimental.pallas import tpu as pltpu


def _toploss2_kernel(x_ref, o_ref, *, p, P):
    # x_ref: (1, P) f32 VMEM, lanes >= p hold -inf
    # o_ref: (1, 1) f32 SMEM scalar loss
    inf = jnp.float32(jnp.inf)
    neg_inf = jnp.float32(-jnp.inf)

    x_row = x_ref[...]                                           # (1, P): beta_pad[i] along lanes
    col1 = jax.lax.broadcasted_iota(jnp.int32, (1, P), 1)        # lane index
    row2 = jax.lax.broadcasted_iota(jnp.int32, (P, P), 0)
    col2 = jax.lax.broadcasted_iota(jnp.int32, (P, P), 1)

    # A[r, c] = min(beta[r .. c]) for c >= r, +inf for c < r,
    # built with a masked log-doubling prefix-min along the lane (c) axis.
    A = jnp.where(col2 >= row2, x_row, inf)                      # x_row broadcast over sublanes

    d = 1
    for _ in range((P - 1).bit_length()):                        # ceil(log2(P)) unrolled steps
        shifts = (d,) if (P - d) == d else (d, P - d)
        for s in shifts:
            src = pltpu.roll(col1, s, axis=1)                    # true source lane of this roll
            cand = pltpu.roll(A, s, axis=1)
            # Accept only contributions from source lanes <= current lane (prefix); the
            # rolled-index gate makes this correct for either roll-direction convention.
            A = jnp.minimum(A, jnp.where(src <= col1, cand, inf))
        d *= 2

    R = jnp.minimum(A, A.T)                                      # symmetric rangemin(j, i)
    x_colmat = jnp.broadcast_to(x_row, (P, P)).T                 # [j, i] -> beta_pad[j]

    # keycol(i): highest level at which vertex i connects to a strictly higher vertex.
    higher = x_colmat > x_row                                    # beta[j] > beta[i]
    keycol = jnp.max(jnp.where(higher, R, neg_inf), axis=0, keepdims=True)       # (1, P)

    # Finite bar lengths; essential bar (keycol == -inf) and padded lanes get 0.
    valid = col1 < p
    lengths = jnp.where(jnp.logical_and(valid, keycol > neg_inf),
                        x_row - keycol, jnp.float32(0.0))        # (1, P), all >= 0

    total = jnp.sum(lengths, axis=1, keepdims=True)              # (1, 1)

    # Top-2 bar lengths (with multiplicity) -> skipped by PartialSumBarcodeLengths(skip=2).
    l1 = jnp.max(lengths, axis=1, keepdims=True)
    n_at_max = jnp.sum(jnp.where(lengths >= l1, 1.0, 0.0), axis=1, keepdims=True)
    l2_below = jnp.max(jnp.where(lengths < l1, lengths, neg_inf), axis=1, keepdims=True)
    l2 = jnp.where(n_at_max >= 2.0, l1, l2_below)

    loss = total - l1 - l2
    o_ref[0, 0] = loss[0, 0]


def toploss2(beta):
    """Pallas implementation of TopLoss2(p).forward(beta).  beta: (p,) float."""
    p = beta.shape[0]
    P = ((p + 127) // 128) * 128                                 # lane-aligned width
    x = jnp.pad(beta.astype(jnp.float32), (0, P - p), constant_values=-jnp.inf)
    out = pl.pallas_call(
        functools.partial(_toploss2_kernel, p=p, P=P),
        out_shape=jax.ShapeDtypeStruct((1, 1), jnp.float32),
        in_specs=[pl.BlockSpec(memory_space=pltpu.MemorySpace.VMEM)],
        out_specs=pl.BlockSpec(memory_space=pltpu.MemorySpace.SMEM),
    )(x.reshape(1, P))
    return out[0, 0]


def _reference_toploss2(beta, skip=2):
    """Pure-python reference: superlevel H0 bar lengths on the path complex via
    union-find + elder rule, then torch-style sort-descending / skip / sum."""
    f = np.asarray(beta, dtype=np.float64)
    g = -f  # superlevel(f) == sublevel(-f); bar lengths coincide
    p = g.shape[0]
    parent = list(range(p))

    def find(i):
        while parent[i] != i:
            parent[i] = parent[parent[i]]
            i = parent[i]
        return i

    birth = g.copy()
    present = [False] * p
    lengths = []
    for v in np.argsort(g, kind="stable"):
        present[v] = True
        for nb in (v - 1, v + 1):
            if 0 <= nb < p and present[nb]:
                edge_val = max(g[v], g[nb])
                rv, rn = find(v), find(nb)
                if rv != rn:
                    # elder rule: the component with the larger (younger) birth dies
                    young, old = (rv, rn) if birth[rv] >= birth[rn] else (rn, rv)
                    lengths.append(edge_val - birth[young])
                    parent[young] = old
    lengths.append(0.0)  # essential (infinite) bar -> zeroed by get_barcode_lengths
    lengths = sorted(lengths, reverse=True)
    return np.float32(sum(lengths[skip:]))


if __name__ == "__main__":
    p = 100  # matches the module's `p = 100`
    key = jax.random.PRNGKey(0)
    beta = jax.random.normal(key, (p,), dtype=jnp.float32)

    loss = jax.jit(toploss2)(beta)
    jax.block_until_ready(loss)

    ref = _reference_toploss2(np.asarray(beta), skip=2)
    np.testing.assert_allclose(np.asarray(loss), ref, rtol=1e-4, atol=1e-4)
    print("KERNEL_OK")
</pallas_src>

<mosaic_0001>
module attributes {stable_mosaic.version = 11 : i64} {
  func.func @_toploss2_kernel(%arg0: memref<1x128xf32, #tpu.memory_space<vmem>>, %arg1: memref<1x1xf32, #tpu.memory_space<smem>>) attributes {dimension_semantics = [], scalar_prefetch = 0 : i64, scratch_operands = 0 : i64, tpu.core_type = #tpu.core_type<tc>} {
    %c0 = arith.constant 0 : index
    %c0_0 = arith.constant 0 : index
    %0 = vector.load %arg0[%c0, %c0_0] : memref<1x128xf32, #tpu.memory_space<vmem>>, vector<1x128xf32>
    %1 = tpu.iota {dimensions = array<i32: 1>} : vector<1x128xi32>
    %2 = tpu.iota {dimensions = array<i32: 0>} : vector<128x128xi32>
    %3 = tpu.iota {dimensions = array<i32: 1>} : vector<128x128xi32>
    %4 = arith.cmpi sge, %3, %2 : vector<128x128xi32>
    %cst = arith.constant 0x7F800000 : f32
    %5 = vector.shape_cast %0 : vector<1x128xf32> to vector<1x128xf32>
    %6 = vector.broadcast %5 : vector<1x128xf32> to vector<128x128xf32>
    %7 = vector.broadcast %cst : f32 to vector<128x128xf32>
    %8 = arith.select %4, %6, %7 : vector<128x128xi1>, vector<128x128xf32>
    %c1_i32 = arith.constant 1 : i32
    %9 = tpu.dynamic_rotate %1 by %c1_i32 dim 1 : vector<1x128xi32>, i32 -> vector<1x128xi32>
    %c1_i32_1 = arith.constant 1 : i32
    %10 = tpu.dynamic_rotate %8 by %c1_i32_1 dim 1 : vector<128x128xf32>, i32 -> vector<128x128xf32>
    %11 = arith.cmpi sle, %9, %1 : vector<1x128xi32>
    %cst_2 = arith.constant 0x7F800000 : f32
    %12 = vector.shape_cast %11 : vector<1x128xi1> to vector<1x128xi1>
    %13 = vector.broadcast %12 : vector<1x128xi1> to vector<128x128xi1>
    %14 = vector.broadcast %cst_2 : f32 to vector<128x128xf32>
    %15 = arith.select %13, %10, %14 : vector<128x128xi1>, vector<128x128xf32>
    %16 = arith.minimumf %8, %15 : vector<128x128xf32>
    %c127_i32 = arith.constant 127 : i32
    %17 = tpu.dynamic_rotate %1 by %c127_i32 dim 1 : vector<1x128xi32>, i32 -> vector<1x128xi32>
    %c127_i32_3 = arith.constant 127 : i32
    %18 = tpu.dynamic_rotate %16 by %c127_i32_3 dim 1 : vector<128x128xf32>, i32 -> vector<128x128xf32>
    %19 = arith.cmpi sle, %17, %1 : vector<1x128xi32>
    %cst_4 = arith.constant 0x7F800000 : f32
    %20 = vector.shape_cast %19 : vector<1x128xi1> to vector<1x128xi1>
    %21 = vector.broadcast %20 : vector<1x128xi1> to vector<128x128xi1>
    %22 = vector.broadcast %cst_4 : f32 to vector<128x128xf32>
    %23 = arith.select %21, %18, %22 : vector<128x128xi1>, vector<128x128xf32>
    %24 = arith.minimumf %16, %23 : vector<128x128xf32>
    %c2_i32 = arith.constant 2 : i32
    %25 = tpu.dynamic_rotate %1 by %c2_i32 dim 1 : vector<1x128xi32>, i32 -> vector<1x128xi32>
    %c2_i32_5 = arith.constant 2 : i32
    %26 = tpu.dynamic_rotate %24 by %c2_i32_5 dim 1 : vector<128x128xf32>, i32 -> vector<128x128xf32>
    %27 = arith.cmpi sle, %25, %1 : vector<1x128xi32>
    %cst_6 = arith.constant 0x7F800000 : f32
    %28 = vector.shape_cast %27 : vector<1x128xi1> to vector<1x128xi1>
    %29 = vector.broadcast %28 : vector<1x128xi1> to vector<128x128xi1>
    %30 = vector.broadcast %cst_6 : f32 to vector<128x128xf32>
    %31 = arith.select %29, %26, %30 : vector<128x128xi1>, vector<128x128xf32>
    %32 = arith.minimumf %24, %31 : vector<128x128xf32>
    %c126_i32 = arith.constant 126 : i32
    %33 = tpu.dynamic_rotate %1 by %c126_i32 dim 1 : vector<1x128xi32>, i32 -> vector<1x128xi32>
    %c126_i32_7 = arith.constant 126 : i32
    %34 = tpu.dynamic_rotate %32 by %c126_i32_7 dim 1 : vector<128x128xf32>, i32 -> vector<128x128xf32>
    %35 = arith.cmpi sle, %33, %1 : vector<1x128xi32>
    %cst_8 = arith.constant 0x7F800000 : f32
    %36 = vector.shape_cast %35 : vector<1x128xi1> to vector<1x128xi1>
    %37 = vector.broadcast %36 : vector<1x128xi1> to vector<128x128xi1>
    %38 = vector.broadcast %cst_8 : f32 to vector<128x128xf32>
    %39 = arith.select %37, %34, %38 : vector<128x128xi1>, vector<128x128xf32>
    %40 = arith.minimumf %32, %39 : vector<128x128xf32>
    %c4_i32 = arith.constant 4 : i32
    %41 = tpu.dynamic_rotate %1 by %c4_i32 dim 1 : vector<1x128xi32>, i32 -> vector<1x128xi32>
    %c4_i32_9 = arith.constant 4 : i32
    %42 = tpu.dynamic_rotate %40 by %c4_i32_9 dim 1 : vector<128x128xf32>, i32 -> vector<128x128xf32>
    %43 = arith.cmpi sle, %41, %1 : vector<1x128xi32>
    %cst_10 = arith.constant 0x7F800000 : f32
    %44 = vector.shape_cast %43 : vector<1x128xi1> to vector<1x128xi1>
    %45 = vector.broadcast %44 : vector<1x128xi1> to vector<128x128xi1>
    %46 = vector.broadcast %cst_10 : f32 to vector<128x128xf32>
    %47 = arith.select %45, %42, %46 : vector<128x128xi1>, vector<128x128xf32>
    %48 = arith.minimumf %40, %47 : vector<128x128xf32>
    %c124_i32 = arith.constant 124 : i32
    %49 = tpu.dynamic_rotate %1 by %c124_i32 dim 1 : vector<1x128xi32>, i32 -> vector<1x128xi32>
    %c124_i32_11 = arith.constant 124 : i32
    %50 = tpu.dynamic_rotate %48 by %c124_i32_11 dim 1 : vector<128x128xf32>, i32 -> vector<128x128xf32>
    %51 = arith.cmpi sle, %49, %1 : vector<1x128xi32>
    %cst_12 = arith.constant 0x7F800000 : f32
    %52 = vector.shape_cast %51 : vector<1x128xi1> to vector<1x128xi1>
    %53 = vector.broadcast %52 : vector<1x128xi1> to vector<128x128xi1>
    %54 = vector.broadcast %cst_12 : f32 to vector<128x128xf32>
    %55 = arith.select %53, %50, %54 : vector<128x128xi1>, vector<128x128xf32>
    %56 = arith.minimumf %48, %55 : vector<128x128xf32>
    %c8_i32 = arith.constant 8 : i32
    %57 = tpu.dynamic_rotate %1 by %c8_i32 dim 1 : vector<1x128xi32>, i32 -> vector<1x128xi32>
    %c8_i32_13 = arith.constant 8 : i32
    %58 = tpu.dynamic_rotate %56 by %c8_i32_13 dim 1 : vector<128x128xf32>, i32 -> vector<128x128xf32>
    %59 = arith.cmpi sle, %57, %1 : vector<1x128xi32>
    %cst_14 = arith.constant 0x7F800000 : f32
    %60 = vector.shape_cast %59 : vector<1x128xi1> to vector<1x128xi1>
    %61 = vector.broadcast %60 : vector<1x128xi1> to vector<128x128xi1>
    %62 = vector.broadcast %cst_14 : f32 to vector<128x128xf32>
    %63 = arith.select %61, %58, %62 : vector<128x128xi1>, vector<128x128xf32>
    %64 = arith.minimumf %56, %63 : vector<128x128xf32>
    %c120_i32 = arith.constant 120 : i32
    %65 = tpu.dynamic_rotate %1 by %c120_i32 dim 1 : vector<1x128xi32>, i32 -> vector<1x128xi32>
    %c120_i32_15 = arith.constant 120 : i32
    %66 = tpu.dynamic_rotate %64 by %c120_i32_15 dim 1 : vector<128x128xf32>, i32 -> vector<128x128xf32>
    %67 = arith.cmpi sle, %65, %1 : vector<1x128xi32>
    %cst_16 = arith.constant 0x7F800000 : f32
    %68 = vector.shape_cast %67 : vector<1x128xi1> to vector<1x128xi1>
    %69 = vector.broadcast %68 : vector<1x128xi1> to vector<128x128xi1>
    %70 = vector.broadcast %cst_16 : f32 to vector<128x128xf32>
    %71 = arith.select %69, %66, %70 : vector<128x128xi1>, vector<128x128xf32>
    %72 = arith.minimumf %64, %71 : vector<128x128xf32>
    %c16_i32 = arith.constant 16 : i32
    %73 = tpu.dynamic_rotate %1 by %c16_i32 dim 1 : vector<1x128xi32>, i32 -> vector<1x128xi32>
    %c16_i32_17 = arith.constant 16 : i32
    %74 = tpu.dynamic_rotate %72 by %c16_i32_17 dim 1 : vector<128x128xf32>, i32 -> vector<128x128xf32>
    %75 = arith.cmpi sle, %73, %1 : vector<1x128xi32>
    %cst_18 = arith.constant 0x7F800000 : f32
    %76 = vector.shape_cast %75 : vector<1x128xi1> to vector<1x128xi1>
    %77 = vector.broadcast %76 : vector<1x128xi1> to vector<128x128xi1>
    %78 = vector.broadcast %cst_18 : f32 to vector<128x128xf32>
    %79 = arith.select %77, %74, %78 : vector<128x128xi1>, vector<128x128xf32>
    %80 = arith.minimumf %72, %79 : vector<128x128xf32>
    %c112_i32 = arith.constant 112 : i32
    %81 = tpu.dynamic_rotate %1 by %c112_i32 dim 1 : vector<1x128xi32>, i32 -> vector<1x128xi32>
    %c112_i32_19 = arith.constant 112 : i32
    %82 = tpu.dynamic_rotate %80 by %c112_i32_19 dim 1 : vector<128x128xf32>, i32 -> vector<128x128xf32>
    %83 = arith.cmpi sle, %81, %1 : vector<1x128xi32>
    %cst_20 = arith.constant 0x7F800000 : f32
    %84 = vector.shape_cast %83 : vector<1x128xi1> to vector<1x128xi1>
    %85 = vector.broadcast %84 : vector<1x128xi1> to vector<128x128xi1>
    %86 = vector.broadcast %cst_20 : f32 to vector<128x128xf32>
    %87 = arith.select %85, %82, %86 : vector<128x128xi1>, vector<128x128xf32>
    %88 = arith.minimumf %80, %87 : vector<128x128xf32>
    %c32_i32 = arith.constant 32 : i32
    %89 = tpu.dynamic_rotate %1 by %c32_i32 dim 1 : vector<1x128xi32>, i32 -> vector<1x128xi32>
    %c32_i32_21 = arith.constant 32 : i32
    %90 = tpu.dynamic_rotate %88 by %c32_i32_21 dim 1 : vector<128x128xf32>, i32 -> vector<128x128xf32>
    %91 = arith.cmpi sle, %89, %1 : vector<1x128xi32>
    %cst_22 = arith.constant 0x7F800000 : f32
    %92 = vector.shape_cast %91 : vector<1x128xi1> to vector<1x128xi1>
    %93 = vector.broadcast %92 : vector<1x128xi1> to vector<128x128xi1>
    %94 = vector.broadcast %cst_22 : f32 to vector<128x128xf32>
    %95 = arith.select %93, %90, %94 : vector<128x128xi1>, vector<128x128xf32>
    %96 = arith.minimumf %88, %95 : vector<128x128xf32>
    %c96_i32 = arith.constant 96 : i32
    %97 = tpu.dynamic_rotate %1 by %c96_i32 dim 1 : vector<1x128xi32>, i32 -> vector<1x128xi32>
    %c96_i32_23 = arith.constant 96 : i32
    %98 = tpu.dynamic_rotate %96 by %c96_i32_23 dim 1 : vector<128x128xf32>, i32 -> vector<128x128xf32>
    %99 = arith.cmpi sle, %97, %1 : vector<1x128xi32>
    %cst_24 = arith.constant 0x7F800000 : f32
    %100 = vector.shape_cast %99 : vector<1x128xi1> to vector<1x128xi1>
    %101 = vector.broadcast %100 : vector<1x128xi1> to vector<128x128xi1>
    %102 = vector.broadcast %cst_24 : f32 to vector<128x128xf32>
    %103 = arith.select %101, %98, %102 : vector<128x128xi1>, vector<128x128xf32>
    %104 = arith.minimumf %96, %103 : vector<128x128xf32>
    %c64_i32 = arith.constant 64 : i32
    %105 = tpu.dynamic_rotate %1 by %c64_i32 dim 1 : vector<1x128xi32>, i32 -> vector<1x128xi32>
    %c64_i32_25 = arith.constant 64 : i32
    %106 = tpu.dynamic_rotate %104 by %c64_i32_25 dim 1 : vector<128x128xf32>, i32 -> vector<128x128xf32>
    %107 = arith.cmpi sle, %105, %1 : vector<1x128xi32>
    %cst_26 = arith.constant 0x7F800000 : f32
    %108 = vector.shape_cast %107 : vector<1x128xi1> to vector<1x128xi1>
    %109 = vector.broadcast %108 : vector<1x128xi1> to vector<128x128xi1>
    %110 = vector.broadcast %cst_26 : f32 to vector<128x128xf32>
    %111 = arith.select %109, %106, %110 : vector<128x128xi1>, vector<128x128xf32>
    %112 = arith.minimumf %104, %111 : vector<128x128xf32>
    %113 = tpu.transpose %112, [1, 0] : vector<128x128xf32> -> vector<128x128xf32>
    %114 = arith.minimumf %112, %113 : vector<128x128xf32>
    %115 = vector.shape_cast %0 : vector<1x128xf32> to vector<1x128xf32>
    %116 = vector.broadcast %115 : vector<1x128xf32> to vector<128x128xf32>
    %117 = tpu.transpose %116, [1, 0] : vector<128x128xf32> -> vector<128x128xf32>
    %118 = vector.broadcast %0 : vector<1x128xf32> to vector<128x128xf32>
    %119 = arith.cmpf ogt, %117, %118 : vector<128x128xf32>
    %cst_27 = arith.constant 0xFF800000 : f32
    %120 = vector.broadcast %cst_27 : f32 to vector<128x128xf32>
    %121 = arith.select %119, %114, %120 : vector<128x128xi1>, vector<128x128xf32>
    %cst_28 = arith.constant dense<0xFF800000> : vector<128xf32>
    %122 = vector.multi_reduction <maximumf>, %121, %cst_28 [0] : vector<128x128xf32> to vector<128xf32>
    %123 = vector.shape_cast %122 : vector<128xf32> to vector<1x128xf32>
    %c100_i32 = arith.constant 100 : i32
    %124 = vector.broadcast %c100_i32 : i32 to vector<1x128xi32>
    %125 = arith.cmpi slt, %1, %124 : vector<1x128xi32>
    %cst_29 = arith.constant 0xFF800000 : f32
    %126 = vector.broadcast %cst_29 : f32 to vector<1x128xf32>
    %127 = arith.cmpf ogt, %123, %126 : vector<1x128xf32>
    %128 = arith.andi %125, %127 : vector<1x128xi1>
    %129 = arith.subf %0, %123 : vector<1x128xf32>
    %cst_30 = arith.constant 0.000000e+00 : f32
    %130 = vector.broadcast %cst_30 : f32 to vector<1x128xf32>
    %131 = arith.select %128, %129, %130 : vector<1x128xi1>, vector<1x128xf32>
    %cst_31 = arith.constant dense<0.000000e+00> : vector<1xf32>
    %132 = vector.multi_reduction <add>, %131, %cst_31 [1] : vector<1x128xf32> to vector<1xf32>
    %133 = vector.shape_cast %132 : vector<1xf32> to vector<1x1xf32>
    %cst_32 = arith.constant dense<0xFF800000> : vector<1xf32>
    %134 = vector.multi_reduction <maximumf>, %131, %cst_32 [1] : vector<1x128xf32> to vector<1xf32>
    %135 = vector.shape_cast %134 : vector<1xf32> to vector<1x1xf32>
    %136 = vector.broadcast %135 : vector<1x1xf32> to vector<1x128xf32>
    %137 = arith.cmpf oge, %131, %136 : vector<1x128xf32>
    %cst_33 = arith.constant 1.000000e+00 : f32
    %cst_34 = arith.constant 0.000000e+00 : f32
    %138 = vector.broadcast %cst_33 : f32 to vector<1x128xf32>
    %139 = vector.broadcast %cst_34 : f32 to vector<1x128xf32>
    %140 = arith.select %137, %138, %139 : vector<1x128xi1>, vector<1x128xf32>
    %cst_35 = arith.constant dense<0.000000e+00> : vector<1xf32>
    %141 = vector.multi_reduction <add>, %140, %cst_35 [1] : vector<1x128xf32> to vector<1xf32>
    %142 = vector.shape_cast %141 : vector<1xf32> to vector<1x1xf32>
    %143 = vector.broadcast %135 : vector<1x1xf32> to vector<1x128xf32>
    %144 = arith.cmpf olt, %131, %143 : vector<1x128xf32>
    %cst_36 = arith.constant 0xFF800000 : f32
    %145 = vector.broadcast %cst_36 : f32 to vector<1x128xf32>
    %146 = arith.select %144, %131, %145 : vector<1x128xi1>, vector<1x128xf32>
    %cst_37 = arith.constant dense<0xFF800000> : vector<1xf32>
    %147 = vector.multi_reduction <maximumf>, %146, %cst_37 [1] : vector<1x128xf32> to vector<1xf32>
    %148 = vector.shape_cast %147 : vector<1xf32> to vector<1x1xf32>
    %cst_38 = arith.constant 2.000000e+00 : f32
    %149 = vector.broadcast %cst_38 : f32 to vector<1x1xf32>
    %150 = arith.cmpf oge, %142, %149 : vector<1x1xf32>
    %151 = arith.select %150, %135, %148 : vector<1x1xi1>, vector<1x1xf32>
    %152 = arith.subf %133, %135 : vector<1x1xf32>
    %153 = arith.subf %152, %151 : vector<1x1xf32>
    %154 = vector.extract %153[0, 0] : f32 from vector<1x1xf32>
    %c0_39 = arith.constant 0 : index
    %c0_40 = arith.constant 0 : index
    %155 = memref.load %arg1[%c0_39, %c0_40] : memref<1x1xf32, #tpu.memory_space<smem>>
    memref.store %154, %arg1[%c0_39, %c0_40] : memref<1x1xf32, #tpu.memory_space<smem>>
    return
  }
}

</mosaic_0001>

<llo_original>
// kernel: toploss2.1
$region0: #{toploss2.1}
  #allocation0 [shape = 'u32[]', space=smem, size = 0x4, offset = 0x4, fixed_abs, tag = 'smem constant byte address 0x4 - core index']
  #allocation1 [shape = 'u32[144,128]{1,0:T(1,128)}', space=vmem, size = 0x12000, scoped, tag = 'internal scratch']
  %s0 = inlined_call_operand.vmem [shape: f32[1,128], index: 0, kind: input, shape index: {}]
  %s1 = inlined_call_operand.hbm [shape: f32[1,1], index: 1, kind: output, shape index: {}]
  %s2 = sld [smem:[#allocation0]]
  $region14: #{toploss2.1} parent=0
    _
  %s4 = ssub.s32 1, %s2
  %s5 = scalar_select 0, %s4, %s2
  $region1: #{toploss2.1} parent=0
    #allocation2 [shape = 'u8[512]{0}', space=smem, size = 0x200, scoped, tag = 'output window, operand 0, single buffered']
    #allocation3 [shape = 's32[1]{0}', space=sflag, size = 0x4, scoped, tag = 'scoped memory for toploss2.1']
    %6 = vsyncpa [#allocation3], 0
    // Predicated region
    $region2: #{toploss2.1} parent=1 // pred_check
      _
    $region3: #{toploss2.1} parent=1 // pred_check_branch
      %8 = sbr.rel (0) target = $region5
    $region4: #{toploss2.1} parent=1 // pred_region
      _
    $region5: #{toploss2.1} parent=1 // pred_fallthru
      _
    %v9 = vld [vmem:[%s0] sm:$0x1]
    %v10 = vlaneseq
    %v11 = vand.u32 %v10, 127
    %v12 = vlaneseq
    %v13 = vshrl.u32 %v12, 7
    %v14 = vadd.s32 %v13, 8
    %v15 = vadd.s32 %v13, 16
    %v16 = vadd.s32 %v13, 24
    %v17 = vadd.s32 %v13, 32
    %v18 = vadd.s32 %v13, 40
    %v19 = vadd.s32 %v13, 48
    %v20 = vadd.s32 %v13, 56
    %v21 = vadd.s32 %v13, 64
    %v22 = vadd.s32 %v13, 72
    %v23 = vadd.s32 %v13, 80
    %v24 = vadd.s32 %v13, 88
    %v25 = vadd.s32 %v13, 96
    %v26 = vadd.s32 %v13, 104
    %v27 = vadd.s32 %v13, 112
    %v28 = vadd.s32 %v13, 120
    %vm29 = vcmp.ge.s32.totalorder %v11, %v13
    %vm30 = vcmp.ge.s32.totalorder %v11, %v14
    %vm31 = vcmp.ge.s32.totalorder %v11, %v15
    %vm32 = vcmp.ge.s32.totalorder %v11, %v16
    %vm33 = vcmp.ge.s32.totalorder %v11, %v17
    %vm34 = vcmp.ge.s32.totalorder %v11, %v18
    %vm35 = vcmp.ge.s32.totalorder %v11, %v19
    %vm36 = vcmp.ge.s32.totalorder %v11, %v20
    %vm37 = vcmp.ge.s32.totalorder %v11, %v21
    %vm38 = vcmp.ge.s32.totalorder %v11, %v22
    %vm39 = vcmp.ge.s32.totalorder %v11, %v23
    %vm40 = vcmp.ge.s32.totalorder %v11, %v24
    %vm41 = vcmp.ge.s32.totalorder %v11, %v25
    %vm42 = vcmp.ge.s32.totalorder %v11, %v26
    %vm43 = vcmp.ge.s32.totalorder %v11, %v27
    %vm44 = vcmp.ge.s32.totalorder %v11, %v28
    %v46 = vlaneseq
    %v47 = vshrl.u32 %v46, 7
    %v48 = vsub.s32 0, %v47
    %v49 = vrot.slane %v9, %v48
    %v51 = vsel %vm29, %v49, inf
    %v52 = vsel %vm30, %v49, inf
    %v53 = vsel %vm31, %v49, inf
    %v54 = vsel %vm32, %v49, inf
    %v55 = vsel %vm33, %v49, inf
    %v56 = vsel %vm34, %v49, inf
    %v57 = vsel %vm35, %v49, inf
    %v58 = vsel %vm36, %v49, inf
    %v59 = vsel %vm37, %v49, inf
    %v60 = vsel %vm38, %v49, inf
    %v61 = vsel %vm39, %v49, inf
    %v62 = vsel %vm40, %v49, inf
    %v63 = vsel %vm41, %v49, inf
    %v64 = vsel %vm42, %v49, inf
    %v65 = vsel %vm43, %v49, inf
    %v66 = vsel %vm44, %v49, inf
    %67 = vrot.lane.b32.xlu0 %v11, 1
    %v68 = vpop.permute.xlu0 %67
    %69 = vrot.lane.b32.xlu0 %v51, 1
    %v70 = vpop.permute.xlu0 %69
    %71 = vrot.lane.b32.xlu0 %v52, 1
    %v72 = vpop.permute.xlu0 %71
    %73 = vrot.lane.b32.xlu0 %v53, 1
    %v74 = vpop.permute.xlu0 %73
    %75 = vrot.lane.b32.xlu0 %v54, 1
    %v76 = vpop.permute.xlu0 %75
    %77 = vrot.lane.b32.xlu0 %v55, 1
    %v78 = vpop.permute.xlu0 %77
    %79 = vrot.lane.b32.xlu0 %v56, 1
    %v80 = vpop.permute.xlu0 %79
    %81 = vrot.lane.b32.xlu0 %v57, 1
    %v82 = vpop.permute.xlu0 %81
    %83 = vrot.lane.b32.xlu0 %v58, 1
    %v84 = vpop.permute.xlu0 %83
    %85 = vrot.lane.b32.xlu0 %v59, 1
    %v86 = vpop.permute.xlu0 %85
    %87 = vrot.lane.b32.xlu0 %v60, 1
    %v88 = vpop.permute.xlu0 %87
    %89 = vrot.lane.b32.xlu0 %v61, 1
    %v90 = vpop.permute.xlu0 %89
    %91 = vrot.lane.b32.xlu0 %v62, 1
    %v92 = vpop.permute.xlu0 %91
    %93 = vrot.lane.b32.xlu0 %v63, 1
    %v94 = vpop.permute.xlu0 %93
    %95 = vrot.lane.b32.xlu0 %v64, 1
    %v96 = vpop.permute.xlu0 %95
    %97 = vrot.lane.b32.xlu0 %v65, 1
    %v98 = vpop.permute.xlu0 %97
    %99 = vrot.lane.b32.xlu0 %v66, 1
    %v100 = vpop.permute.xlu0 %99
    %vm101 = vcmp.le.s32.totalorder %v68, %v11
    %v102 = vsel %vm101, 1, 0
    %v103 = vlaneseq
    %v104 = vshrl.u32 %v103, 7
    %v105 = vsub.s32 0, %v104
    %v106 = vrot.slane %v102, %v105
    %vm107 = vcmp.eq.s32.totalorder %v106, 1
    %v108 = vsel %vm107, %v70, inf
    %v109 = vsel %vm107, %v72, inf
    %v110 = vsel %vm107, %v74, inf
    %v111 = vsel %vm107, %v76, inf
    %v112 = vsel %vm107, %v78, inf
    %v113 = vsel %vm107, %v80, inf
    %v114 = vsel %vm107, %v82, inf
    %v115 = vsel %vm107, %v84, inf
    %v116 = vsel %vm107, %v86, inf
    %v117 = vsel %vm107, %v88, inf
    %v118 = vsel %vm107, %v90, inf
    %v119 = vsel %vm107, %v92, inf
    %v120 = vsel %vm107, %v94, inf
    %v121 = vsel %vm107, %v96, inf
    %v122 = vsel %vm107, %v98, inf
    %v123 = vsel %vm107, %v100, inf
    %v124 = vmin.f32 %v51, %v108
    %v125 = vmin.f32 %v52, %v109
    %v126 = vmin.f32 %v53, %v110
    %v127 = vmin.f32 %v54, %v111
    %v128 = vmin.f32 %v55, %v112
    %v129 = vmin.f32 %v56, %v113
    %v130 = vmin.f32 %v57, %v114
    %v131 = vmin.f32 %v58, %v115
    %v132 = vmin.f32 %v59, %v116
    %v133 = vmin.f32 %v60, %v117
    %v134 = vmin.f32 %v61, %v118
    %v135 = vmin.f32 %v62, %v119
    %v136 = vmin.f32 %v63, %v120
    %v137 = vmin.f32 %v64, %v121
    %v138 = vmin.f32 %v65, %v122
    %v139 = vmin.f32 %v66, %v123
    %140 = vrot.lane.b32.xlu0 %v11, 127
    %v141 = vpop.permute.xlu0 %140
    %142 = vrot.lane.b32.xlu0 %v124, 127
    %v143 = vpop.permute.xlu0 %142
    %144 = vrot.lane.b32.xlu0 %v125, 127
    %v145 = vpop.permute.xlu0 %144
    %146 = vrot.lane.b32.xlu0 %v126, 127
    %v147 = vpop.permute.xlu0 %146
    %148 = vrot.lane.b32.xlu0 %v127, 127
    %v149 = vpop.permute.xlu0 %148
    %150 = vrot.lane.b32.xlu0 %v128, 127
    %v151 = vpop.permute.xlu0 %150
    %152 = vrot.lane.b32.xlu0 %v129, 127
    %v153 = vpop.permute.xlu0 %152
    %154 = vrot.lane.b32.xlu0 %v130, 127
    %v155 = vpop.permute.xlu0 %154
    %156 = vrot.lane.b32.xlu0 %v131, 127
    %v157 = vpop.permute.xlu0 %156
    %158 = vrot.lane.b32.xlu0 %v132, 127
    %v159 = vpop.permute.xlu0 %158
    %160 = vrot.lane.b32.xlu0 %v133, 127
    %v161 = vpop.permute.xlu0 %160
    %162 = vrot.lane.b32.xlu0 %v134, 127
    %v163 = vpop.permute.xlu0 %162
    %164 = vrot.lane.b32.xlu0 %v135, 127
    %v165 = vpop.permute.xlu0 %164
    %166 = vrot.lane.b32.xlu0 %v136, 127
    %v167 = vpop.permute.xlu0 %166
    %168 = vrot.lane.b32.xlu0 %v137, 127
    %v169 = vpop.permute.xlu0 %168
    %170 = vrot.lane.b32.xlu0 %v138, 127
    %v171 = vpop.permute.xlu0 %170
    %172 = vrot.lane.b32.xlu0 %v139, 127
    %v173 = vpop.permute.xlu0 %172
    %vm174 = vcmp.le.s32.totalorder %v141, %v11
    %v175 = vsel %vm174, 1, 0
    %v176 = vlaneseq
    %v177 = vshrl.u32 %v176, 7
    %v178 = vsub.s32 0, %v177
    %v179 = vrot.slane %v175, %v178
    %vm180 = vcmp.eq.s32.totalorder %v179, 1
    %v181 = vsel %vm180, %v143, inf
    %v182 = vsel %vm180, %v145, inf
    %v183 = vsel %vm180, %v147, inf
    %v184 = vsel %vm180, %v149, inf
    %v185 = vsel %vm180, %v151, inf
    %v186 = vsel %vm180, %v153, inf
    %v187 = vsel %vm180, %v155, inf
    %v188 = vsel %vm180, %v157, inf
    %v189 = vsel %vm180, %v159, inf
    %v190 = vsel %vm180, %v161, inf
    %v191 = vsel %vm180, %v163, inf
    %v192 = vsel %vm180, %v165, inf
    %v193 = vsel %vm180, %v167, inf
    %v194 = vsel %vm180, %v169, inf
    %v195 = vsel %vm180, %v171, inf
    %v196 = vsel %vm180, %v173, inf
    %v197 = vmin.f32 %v124, %v181
    %v198 = vmin.f32 %v125, %v182
    %v199 = vmin.f32 %v126, %v183
    %v200 = vmin.f32 %v127, %v184
    %v201 = vmin.f32 %v128, %v185
    %v202 = vmin.f32 %v129, %v186
    %v203 = vmin.f32 %v130, %v187
    %v204 = vmin.f32 %v131, %v188
    %v205 = vmin.f32 %v132, %v189
    %v206 = vmin.f32 %v133, %v190
    %v207 = vmin.f32 %v134, %v191
    %v208 = vmin.f32 %v135, %v192
    %v209 = vmin.f32 %v136, %v193
    %v210 = vmin.f32 %v137, %v194
    %v211 = vmin.f32 %v138, %v195
    %v212 = vmin.f32 %v139, %v196
    %213 = vrot.lane.b32.xlu0 %v11, 2
    %v214 = vpop.permute.xlu0 %213
    %215 = vrot.lane.b32.xlu0 %v197, 2
    %v216 = vpop.permute.xlu0 %215
    %217 = vrot.lane.b32.xlu0 %v198, 2
    %v218 = vpop.permute.xlu0 %217
    %219 = vrot.lane.b32.xlu0 %v199, 2
    %v220 = vpop.permute.xlu0 %219
    %221 = vrot.lane.b32.xlu0 %v200, 2
    %v222 = vpop.permute.xlu0 %221
    %223 = vrot.lane.b32.xlu0 %v201, 2
    %v224 = vpop.permute.xlu0 %223
    %225 = vrot.lane.b32.xlu0 %v202, 2
    %v226 = vpop.permute.xlu0 %225
    %227 = vrot.lane.b32.xlu0 %v203, 2
    %v228 = vpop.permute.xlu0 %227
    %229 = vrot.lane.b32.xlu0 %v204, 2
    %v230 = vpop.permute.xlu0 %229
    %231 = vrot.lane.b32.xlu0 %v205, 2
    %v232 = vpop.permute.xlu0 %231
    %233 = vrot.lane.b32.xlu0 %v206, 2
    %v234 = vpop.permute.xlu0 %233
    %235 = vrot.lane.b32.xlu0 %v207, 2
    %v236 = vpop.permute.xlu0 %235
    %237 = vrot.lane.b32.xlu0 %v208, 2
    %v238 = vpop.permute.xlu0 %237
    %239 = vrot.lane.b32.xlu0 %v209, 2
    %v240 = vpop.permute.xlu0 %239
    %241 = vrot.lane.b32.xlu0 %v210, 2
    %v242 = vpop.permute.xlu0 %241
    %243 = vrot.lane.b32.xlu0 %v211, 2
    %v244 = vpop.permute.xlu0 %243
    %245 = vrot.lane.b32.xlu0 %v212, 2
    %v246 = vpop.permute.xlu0 %245
    %vm247 = vcmp.le.s32.totalorder %v214, %v11
    %v248 = vsel %vm247, 1, 0
    %v249 = vlaneseq
    %v250 = vshrl.u32 %v249, 7
    %v251 = vsub.s32 0, %v250
    %v252 = vrot.slane %v248, %v251
    %vm253 = vcmp.eq.s32.totalorder %v252, 1
    %v254 = vsel %vm253, %v216, inf
    %v255 = vsel %vm253, %v218, inf
    %v256 = vsel %vm253, %v220, inf
    %v257 = vsel %vm253, %v222, inf
    %v258 = vsel %vm253, %v224, inf
    %v259 = vsel %vm253, %v226, inf
    %v260 = vsel %vm253, %v228, inf
    %v261 = vsel %vm253, %v230, inf
    %v262 = vsel %vm253, %v232, inf
    %v263 = vsel %vm253, %v234, inf
    %v264 = vsel %vm253, %v236, inf
    %v265 = vsel %vm253, %v238, inf
    %v266 = vsel %vm253, %v240, inf
    %v267 = vsel %vm253, %v242, inf
    %v268 = vsel %vm253, %v244, inf
    %v269 = vsel %vm253, %v246, inf
    %v270 = vmin.f32 %v197, %v254
    %v271 = vmin.f32 %v198, %v255
    %v272 = vmin.f32 %v199, %v256
    %v273 = vmin.f32 %v200, %v257
    %v274 = vmin.f32 %v201, %v258
    %v275 = vmin.f32 %v202, %v259
    %v276 = vmin.f32 %v203, %v260
    %v277 = vmin.f32 %v204, %v261
    %v278 = vmin.f32 %v205, %v262
    %v279 = vmin.f32 %v206, %v263
    %v280 = vmin.f32 %v207, %v264
    %v281 = vmin.f32 %v208, %v265
    %v282 = vmin.f32 %v209, %v266
    %v283 = vmin.f32 %v210, %v267
    %v284 = vmin.f32 %v211, %v268
    %v285 = vmin.f32 %v212, %v269
    %286 = vrot.lane.b32.xlu0 %v11, 126
    %v287 = vpop.permute.xlu0 %286
    %288 = vrot.lane.b32.xlu0 %v270, 126
    %v289 = vpop.permute.xlu0 %288
    %290 = vrot.lane.b32.xlu0 %v271, 126
    %v291 = vpop.permute.xlu0 %290
    %292 = vrot.lane.b32.xlu0 %v272, 126
    %v293 = vpop.permute.xlu0 %292
    %294 = vrot.lane.b32.xlu0 %v273, 126
    %v295 = vpop.permute.xlu0 %294
    %296 = vrot.lane.b32.xlu0 %v274, 126
    %v297 = vpop.permute.xlu0 %296
    %298 = vrot.lane.b32.xlu0 %v275, 126
    %v299 = vpop.permute.xlu0 %298
    %300 = vrot.lane.b32.xlu0 %v276, 126
    %v301 = vpop.permute.xlu0 %300
    %302 = vrot.lane.b32.xlu0 %v277, 126
    %v303 = vpop.permute.xlu0 %302
    %304 = vrot.lane.b32.xlu0 %v278, 126
    %v305 = vpop.permute.xlu0 %304
    %306 = vrot.lane.b32.xlu0 %v279, 126
    %v307 = vpop.permute.xlu0 %306
    %308 = vrot.lane.b32.xlu0 %v280, 126
    %v309 = vpop.permute.xlu0 %308
    %310 = vrot.lane.b32.xlu0 %v281, 126
    %v311 = vpop.permute.xlu0 %310
    %312 = vrot.lane.b32.xlu0 %v282, 126
    %v313 = vpop.permute.xlu0 %312
    %314 = vrot.lane.b32.xlu0 %v283, 126
    %v315 = vpop.permute.xlu0 %314
    %316 = vrot.lane.b32.xlu0 %v284, 126
    %v317 = vpop.permute.xlu0 %316
    %318 = vrot.lane.b32.xlu0 %v285, 126
    %v319 = vpop.permute.xlu0 %318
    %vm320 = vcmp.le.s32.totalorder %v287, %v11
    %v321 = vsel %vm320, 1, 0
    %v322 = vlaneseq
    %v323 = vshrl.u32 %v322, 7
    %v324 = vsub.s32 0, %v323
    %v325 = vrot.slane %v321, %v324
    %vm326 = vcmp.eq.s32.totalorder %v325, 1
    %v327 = vsel %vm326, %v289, inf
    %v328 = vsel %vm326, %v291, inf
    %v329 = vsel %vm326, %v293, inf
    %v330 = vsel %vm326, %v295, inf
    %v331 = vsel %vm326, %v297, inf
    %v332 = vsel %vm326, %v299, inf
    %v333 = vsel %vm326, %v301, inf
    %v334 = vsel %vm326, %v303, inf
    %v335 = vsel %vm326, %v305, inf
    %v336 = vsel %vm326, %v307, inf
    %v337 = vsel %vm326, %v309, inf
    %v338 = vsel %vm326, %v311, inf
    %v339 = vsel %vm326, %v313, inf
    %v340 = vsel %vm326, %v315, inf
    %v341 = vsel %vm326, %v317, inf
    %v342 = vsel %vm326, %v319, inf
    %v343 = vmin.f32 %v270, %v327
    %v344 = vmin.f32 %v271, %v328
    %v345 = vmin.f32 %v272, %v329
    %v346 = vmin.f32 %v273, %v330
    %v347 = vmin.f32 %v274, %v331
    %v348 = vmin.f32 %v275, %v332
    %v349 = vmin.f32 %v276, %v333
    %v350 = vmin.f32 %v277, %v334
    %v351 = vmin.f32 %v278, %v335
    %v352 = vmin.f32 %v279, %v336
    %v353 = vmin.f32 %v280, %v337
    %v354 = vmin.f32 %v281, %v338
    %v355 = vmin.f32 %v282, %v339
    %v356 = vmin.f32 %v283, %v340
    %v357 = vmin.f32 %v284, %v341
    %v358 = vmin.f32 %v285, %v342
    %359 = vrot.lane.b32.xlu0 %v11, 4
    %v360 = vpop.permute.xlu0 %359
    %361 = vrot.lane.b32.xlu0 %v343, 4
    %v362 = vpop.permute.xlu0 %361
    %363 = vrot.lane.b32.xlu0 %v344, 4
    %v364 = vpop.permute.xlu0 %363
    %365 = vrot.lane.b32.xlu0 %v345, 4
    %v366 = vpop.permute.xlu0 %365
    %367 = vrot.lane.b32.xlu0 %v346, 4
    %v368 = vpop.permute.xlu0 %367
    %369 = vrot.lane.b32.xlu0 %v347, 4
    %v370 = vpop.permute.xlu0 %369
    %371 = vrot.lane.b32.xlu0 %v348, 4
    %v372 = vpop.permute.xlu0 %371
    %373 = vrot.lane.b32.xlu0 %v349, 4
    %v374 = vpop.permute.xlu0 %373
    %375 = vrot.lane.b32.xlu0 %v350, 4
    %v376 = vpop.permute.xlu0 %375
    %377 = vrot.lane.b32.xlu0 %v351, 4
    %v378 = vpop.permute.xlu0 %377
    %379 = vrot.lane.b32.xlu0 %v352, 4
    %v380 = vpop.permute.xlu0 %379
    %381 = vrot.lane.b32.xlu0 %v353, 4
    %v382 = vpop.permute.xlu0 %381
    %383 = vrot.lane.b32.xlu0 %v354, 4
    %v384 = vpop.permute.xlu0 %383
    %385 = vrot.lane.b32.xlu0 %v355, 4
    %v386 = vpop.permute.xlu0 %385
    %387 = vrot.lane.b32.xlu0 %v356, 4
    %v388 = vpop.permute.xlu0 %387
    %389 = vrot.lane.b32.xlu0 %v357, 4
    %v390 = vpop.permute.xlu0 %389
    %391 = vrot.lane.b32.xlu0 %v358, 4
    %v392 = vpop.permute.xlu0 %391
    %vm393 = vcmp.le.s32.totalorder %v360, %v11
    %v394 = vsel %vm393, 1, 0
    %v395 = vlaneseq
    %v396 = vshrl.u32 %v395, 7
    %v397 = vsub.s32 0, %v396
    %v398 = vrot.slane %v394, %v397
    %vm399 = vcmp.eq.s32.totalorder %v398, 1
    %v400 = vsel %vm399, %v362, inf
    %v401 = vsel %vm399, %v364, inf
    %v402 = vsel %vm399, %v366, inf
    %v403 = vsel %vm399, %v368, inf
    %v404 = vsel %vm399, %v370, inf
    %v405 = vsel %vm399, %v372, inf
    %v406 = vsel %vm399, %v374, inf
    %v407 = vsel %vm399, %v376, inf
    %v408 = vsel %vm399, %v378, inf
    %v409 = vsel %vm399, %v380, inf
    %v410 = vsel %vm399, %v382, inf
    %v411 = vsel %vm399, %v384, inf
    %v412 = vsel %vm399, %v386, inf
    %v413 = vsel %vm399, %v388, inf
    %v414 = vsel %vm399, %v390, inf
    %v415 = vsel %vm399, %v392, inf
    %v416 = vmin.f32 %v343, %v400
    %v417 = vmin.f32 %v344, %v401
    %v418 = vmin.f32 %v345, %v402
    %v419 = vmin.f32 %v346, %v403
    %v420 = vmin.f32 %v347, %v404
    %v421 = vmin.f32 %v348, %v405
    %v422 = vmin.f32 %v349, %v406
    %v423 = vmin.f32 %v350, %v407
    %v424 = vmin.f32 %v351, %v408
    %v425 = vmin.f32 %v352, %v409
    %v426 = vmin.f32 %v353, %v410
    %v427 = vmin.f32 %v354, %v411
    %v428 = vmin.f32 %v355, %v412
    %v429 = vmin.f32 %v356, %v413
    %v430 = vmin.f32 %v357, %v414
    %v431 = vmin.f32 %v358, %v415
    %432 = vrot.lane.b32.xlu0 %v11, 124
    %v433 = vpop.permute.xlu0 %432
    %434 = vrot.lane.b32.xlu0 %v416, 124
    %v435 = vpop.permute.xlu0 %434
    %436 = vrot.lane.b32.xlu0 %v417, 124
    %v437 = vpop.permute.xlu0 %436
    %438 = vrot.lane.b32.xlu0 %v418, 124
    %v439 = vpop.permute.xlu0 %438
    %440 = vrot.lane.b32.xlu0 %v419, 124
    %v441 = vpop.permute.xlu0 %440
    %442 = vrot.lane.b32.xlu0 %v420, 124
    %v443 = vpop.permute.xlu0 %442
    %444 = vrot.lane.b32.xlu0 %v421, 124
    %v445 = vpop.permute.xlu0 %444
    %446 = vrot.lane.b32.xlu0 %v422, 124
    %v447 = vpop.permute.xlu0 %446
    %448 = vrot.lane.b32.xlu0 %v423, 124
    %v449 = vpop.permute.xlu0 %448
    %450 = vrot.lane.b32.xlu0 %v424, 124
    %v451 = vpop.permute.xlu0 %450
    %452 = vrot.lane.b32.xlu0 %v425, 124
    %v453 = vpop.permute.xlu0 %452
    %454 = vrot.lane.b32.xlu0 %v426, 124
    %v455 = vpop.permute.xlu0 %454
    %456 = vrot.lane.b32.xlu0 %v427, 124
    %v457 = vpop.permute.xlu0 %456
    %458 = vrot.lane.b32.xlu0 %v428, 124
    %v459 = vpop.permute.xlu0 %458
    %460 = vrot.lane.b32.xlu0 %v429, 124
    %v461 = vpop.permute.xlu0 %460
    %462 = vrot.lane.b32.xlu0 %v430, 124
    %v463 = vpop.permute.xlu0 %462
    %464 = vrot.lane.b32.xlu0 %v431, 124
    %v465 = vpop.permute.xlu0 %464
    %vm466 = vcmp.le.s32.totalorder %v433, %v11
    %v467 = vsel %vm466, 1, 0
    %v468 = vlaneseq
    %v469 = vshrl.u32 %v468, 7
    %v470 = vsub.s32 0, %v469
    %v471 = vrot.slane %v467, %v470
    %vm472 = vcmp.eq.s32.totalorder %v471, 1
    %v473 = vsel %vm472, %v435, inf
    %v474 = vsel %vm472, %v437, inf
    %v475 = vsel %vm472, %v439, inf
    %v476 = vsel %vm472, %v441, inf
    %v477 = vsel %vm472, %v443, inf
    %v478 = vsel %vm472, %v445, inf
    %v479 = vsel %vm472, %v447, inf
    %v480 = vsel %vm472, %v449, inf
    %v481 = vsel %vm472, %v451, inf
    %v482 = vsel %vm472, %v453, inf
    %v483 = vsel %vm472, %v455, inf
    %v484 = vsel %vm472, %v457, inf
    %v485 = vsel %vm472, %v459, inf
    %v486 = vsel %vm472, %v461, inf
    %v487 = vsel %vm472, %v463, inf
    %v488 = vsel %vm472, %v465, inf
    %v489 = vmin.f32 %v416, %v473
    %v490 = vmin.f32 %v417, %v474
    %v491 = vmin.f32 %v418, %v475
    %v492 = vmin.f32 %v419, %v476
    %v493 = vmin.f32 %v420, %v477
    %v494 = vmin.f32 %v421, %v478
    %v495 = vmin.f32 %v422, %v479
    %v496 = vmin.f32 %v423, %v480
    %v497 = vmin.f32 %v424, %v481
    %v498 = vmin.f32 %v425, %v482
    %v499 = vmin.f32 %v426, %v483
    %v500 = vmin.f32 %v427, %v484
    %v501 = vmin.f32 %v428, %v485
    %v502 = vmin.f32 %v429, %v486
    %v503 = vmin.f32 %v430, %v487
    %v504 = vmin.f32 %v431, %v488
    %505 = vrot.lane.b32.xlu0 %v11, 8
    %v506 = vpop.permute.xlu0 %505
    %507 = vrot.lane.b32.xlu0 %v489, 8
    %v508 = vpop.permute.xlu0 %507
    %509 = vrot.lane.b32.xlu0 %v490, 8
    %v510 = vpop.permute.xlu0 %509
    %511 = vrot.lane.b32.xlu0 %v491, 8
    %v512 = vpop.permute.xlu0 %511
    %513 = vrot.lane.b32.xlu0 %v492, 8
    %v514 = vpop.permute.xlu0 %513
    %515 = vrot.lane.b32.xlu0 %v493, 8
    %v516 = vpop.permute.xlu0 %515
    %517 = vrot.lane.b32.xlu0 %v494, 8
    %v518 = vpop.permute.xlu0 %517
    %519 = vrot.lane.b32.xlu0 %v495, 8
    %v520 = vpop.permute.xlu0 %519
    %521 = vrot.lane.b32.xlu0 %v496, 8
    %v522 = vpop.permute.xlu0 %521
    %523 = vrot.lane.b32.xlu0 %v497, 8
    %v524 = vpop.permute.xlu0 %523
    %525 = vrot.lane.b32.xlu0 %v498, 8
    %v526 = vpop.permute.xlu0 %525
    %527 = vrot.lane.b32.xlu0 %v499, 8
    %v528 = vpop.permute.xlu0 %527
    %529 = vrot.lane.b32.xlu0 %v500, 8
    %v530 = vpop.permute.xlu0 %529
    %531 = vrot.lane.b32.xlu0 %v501, 8
    %v532 = vpop.permute.xlu0 %531
    %533 = vrot.lane.b32.xlu0 %v502, 8
    %v534 = vpop.permute.xlu0 %533
    %535 = vrot.lane.b32.xlu0 %v503, 8
    %v536 = vpop.permute.xlu0 %535
    %537 = vrot.lane.b32.xlu0 %v504, 8
    %v538 = vpop.permute.xlu0 %537
    %vm539 = vcmp.le.s32.totalorder %v506, %v11
    %v540 = vsel %vm539, 1, 0
    %v541 = vlaneseq
    %v542 = vshrl.u32 %v541, 7
    %v543 = vsub.s32 0, %v542
    %v544 = vrot.slane %v540, %v543
    %vm545 = vcmp.eq.s32.totalorder %v544, 1
    %v546 = vsel %vm545, %v508, inf
    %v547 = vsel %vm545, %v510, inf
    %v548 = vsel %vm545, %v512, inf
    %v549 = vsel %vm545, %v514, inf
    %v550 = vsel %vm545, %v516, inf
    %v551 = vsel %vm545, %v518, inf
    %v552 = vsel %vm545, %v520, inf
    %v553 = vsel %vm545, %v522, inf
    %v554 = vsel %vm545, %v524, inf
    %v555 = vsel %vm545, %v526, inf
    %v556 = vsel %vm545, %v528, inf
    %v557 = vsel %vm545, %v530, inf
    %v558 = vsel %vm545, %v532, inf
    %v559 = vsel %vm545, %v534, inf
    %v560 = vsel %vm545, %v536, inf
    %v561 = vsel %vm545, %v538, inf
    %v562 = vmin.f32 %v489, %v546
    %v563 = vmin.f32 %v490, %v547
    %v564 = vmin.f32 %v491, %v548
    %v565 = vmin.f32 %v492, %v549
    %v566 = vmin.f32 %v493, %v550
    %v567 = vmin.f32 %v494, %v551
    %v568 = vmin.f32 %v495, %v552
    %v569 = vmin.f32 %v496, %v553
    %v570 = vmin.f32 %v497, %v554
    %v571 = vmin.f32 %v498, %v555
    %v572 = vmin.f32 %v499, %v556
    %v573 = vmin.f32 %v500, %v557
    %v574 = vmin.f32 %v501, %v558
    %v575 = vmin.f32 %v502, %v559
    %v576 = vmin.f32 %v503, %v560
    %v577 = vmin.f32 %v504, %v561
    %578 = vrot.lane.b32.xlu0 %v11, 120
    %v579 = vpop.permute.xlu0 %578
    %580 = vrot.lane.b32.xlu0 %v562, 120
    %v581 = vpop.permute.xlu0 %580
    %582 = vrot.lane.b32.xlu0 %v563, 120
    %v583 = vpop.permute.xlu0 %582
    %584 = vrot.lane.b32.xlu0 %v564, 120
    %v585 = vpop.permute.xlu0 %584
    %586 = vrot.lane.b32.xlu0 %v565, 120
    %v587 = vpop.permute.xlu0 %586
    %588 = vrot.lane.b32.xlu0 %v566, 120
    %v589 = vpop.permute.xlu0 %588
    %590 = vrot.lane.b32.xlu0 %v567, 120
    %v591 = vpop.permute.xlu0 %590
    %592 = vrot.lane.b32.xlu0 %v568, 120
    %v593 = vpop.permute.xlu0 %592
    %594 = vrot.lane.b32.xlu0 %v569, 120
    %v595 = vpop.permute.xlu0 %594
    %596 = vrot.lane.b32.xlu0 %v570, 120
    %v597 = vpop.permute.xlu0 %596
    %598 = vrot.lane.b32.xlu0 %v571, 120
    %v599 = vpop.permute.xlu0 %598
    %600 = vrot.lane.b32.xlu0 %v572, 120
    %v601 = vpop.permute.xlu0 %600
    %602 = vrot.lane.b32.xlu0 %v573, 120
    %v603 = vpop.permute.xlu0 %602
    %604 = vrot.lane.b32.xlu0 %v574, 120
    %v605 = vpop.permute.xlu0 %604
    %606 = vrot.lane.b32.xlu0 %v575, 120
    %v607 = vpop.permute.xlu0 %606
    %608 = vrot.lane.b32.xlu0 %v576, 120
    %v609 = vpop.permute.xlu0 %608
    %610 = vrot.lane.b32.xlu0 %v577, 120
    %v611 = vpop.permute.xlu0 %610
    %vm612 = vcmp.le.s32.totalorder %v579, %v11
    %v613 = vsel %vm612, 1, 0
    %v614 = vlaneseq
    %v615 = vshrl.u32 %v614, 7
    %v616 = vsub.s32 0, %v615
    %v617 = vrot.slane %v613, %v616
    %vm618 = vcmp.eq.s32.totalorder %v617, 1
    %v619 = vsel %vm618, %v581, inf
    %v620 = vsel %vm618, %v583, inf
    %v621 = vsel %vm618, %v585, inf
    %v622 = vsel %vm618, %v587, inf
    %v623 = vsel %vm618, %v589, inf
    %v624 = vsel %vm618, %v591, inf
    %v625 = vsel %vm618, %v593, inf
    %v626 = vsel %vm618, %v595, inf
    %v627 = vsel %vm618, %v597, inf
    %v628 = vsel %vm618, %v599, inf
    %v629 = vsel %vm618, %v601, inf
    %v630 = vsel %vm618, %v603, inf
    %v631 = vsel %vm618, %v605, inf
    %v632 = vsel %vm618, %v607, inf
    %v633 = vsel %vm618, %v609, inf
    %v634 = vsel %vm618, %v611, inf
    %v635 = vmin.f32 %v562, %v619
    %v636 = vmin.f32 %v563, %v620
    %v637 = vmin.f32 %v564, %v621
    %v638 = vmin.f32 %v565, %v622
    %v639 = vmin.f32 %v566, %v623
    %v640 = vmin.f32 %v567, %v624
    %v641 = vmin.f32 %v568, %v625
    %v642 = vmin.f32 %v569, %v626
    %v643 = vmin.f32 %v570, %v627
    %v644 = vmin.f32 %v571, %v628
    %v645 = vmin.f32 %v572, %v629
    %v646 = vmin.f32 %v573, %v630
    %v647 = vmin.f32 %v574, %v631
    %v648 = vmin.f32 %v575, %v632
    %v649 = vmin.f32 %v576, %v633
    %v650 = vmin.f32 %v577, %v634
    %651 = vrot.lane.b32.xlu0 %v11, 16
    %v652 = vpop.permute.xlu0 %651
    %653 = vrot.lane.b32.xlu0 %v635, 16
    %v654 = vpop.permute.xlu0 %653
    %655 = vrot.lane.b32.xlu0 %v636, 16
    %v656 = vpop.permute.xlu0 %655
    %657 = vrot.lane.b32.xlu0 %v637, 16
    %v658 = vpop.permute.xlu0 %657
    %659 = vrot.lane.b32.xlu0 %v638, 16
    %v660 = vpop.permute.xlu0 %659
    %661 = vrot.lane.b32.xlu0 %v639, 16
    %v662 = vpop.permute.xlu0 %661
    %663 = vrot.lane.b32.xlu0 %v640, 16
    %v664 = vpop.permute.xlu0 %663
    %665 = vrot.lane.b32.xlu0 %v641, 16
    %v666 = vpop.permute.xlu0 %665
    %667 = vrot.lane.b32.xlu0 %v642, 16
    %v668 = vpop.permute.xlu0 %667
    %669 = vrot.lane.b32.xlu0 %v643, 16
    %v670 = vpop.permute.xlu0 %669
    %671 = vrot.lane.b32.xlu0 %v644, 16
    %v672 = vpop.permute.xlu0 %671
    %673 = vrot.lane.b32.xlu0 %v645, 16
    %v674 = vpop.permute.xlu0 %673
    %675 = vrot.lane.b32.xlu0 %v646, 16
    %v676 = vpop.permute.xlu0 %675
    %677 = vrot.lane.b32.xlu0 %v647, 16
    %v678 = vpop.permute.xlu0 %677
    %679 = vrot.lane.b32.xlu0 %v648, 16
    %v680 = vpop.permute.xlu0 %679
    %681 = vrot.lane.b32.xlu0 %v649, 16
    %v682 = vpop.permute.xlu0 %681
    %683 = vrot.lane.b32.xlu0 %v650, 16
    %v684 = vpop.permute.xlu0 %683
    %vm685 = vcmp.le.s32.totalorder %v652, %v11
    %v686 = vsel %vm685, 1, 0
    %v687 = vlaneseq
    %v688 = vshrl.u32 %v687, 7
    %v689 = vsub.s32 0, %v688
    %v690 = vrot.slane %v686, %v689
    %vm691 = vcmp.eq.s32.totalorder %v690, 1
    %v692 = vsel %vm691, %v654, inf
    %v693 = vsel %vm691, %v656, inf
    %v694 = vsel %vm691, %v658, inf
    %v695 = vsel %vm691, %v660, inf
    %v696 = vsel %vm691, %v662, inf
    %v697 = vsel %vm691, %v664, inf
    %v698 = vsel %vm691, %v666, inf
    %v699 = vsel %vm691, %v668, inf
    %v700 = vsel %vm691, %v670, inf
    %v701 = vsel %vm691, %v672, inf
    %v702 = vsel %vm691, %v674, inf
    %v703 = vsel %vm691, %v676, inf
    %v704 = vsel %vm691, %v678, inf
    %v705 = vsel %vm691, %v680, inf
    %v706 = vsel %vm691, %v682, inf
    %v707 = vsel %vm691, %v684, inf
    %v708 = vmin.f32 %v635, %v692
    %v709 = vmin.f32 %v636, %v693
    %v710 = vmin.f32 %v637, %v694
    %v711 = vmin.f32 %v638, %v695
    %v712 = vmin.f32 %v639, %v696
    %v713 = vmin.f32 %v640, %v697
    %v714 = vmin.f32 %v641, %v698
    %v715 = vmin.f32 %v642, %v699
    %v716 = vmin.f32 %v643, %v700
    %v717 = vmin.f32 %v644, %v701
    %v718 = vmin.f32 %v645, %v702
    %v719 = vmin.f32 %v646, %v703
    %v720 = vmin.f32 %v647, %v704
    %v721 = vmin.f32 %v648, %v705
    %v722 = vmin.f32 %v649, %v706
    %v723 = vmin.f32 %v650, %v707
    %724 = vrot.lane.b32.xlu0 %v11, 112
    %v725 = vpop.permute.xlu0 %724
    %726 = vrot.lane.b32.xlu0 %v708, 112
    %v727 = vpop.permute.xlu0 %726
    %728 = vrot.lane.b32.xlu0 %v709, 112
    %v729 = vpop.permute.xlu0 %728
    %730 = vrot.lane.b32.xlu0 %v710, 112
    %v731 = vpop.permute.xlu0 %730
    %732 = vrot.lane.b32.xlu0 %v711, 112
    %v733 = vpop.permute.xlu0 %732
    %734 = vrot.lane.b32.xlu0 %v712, 112
    %v735 = vpop.permute.xlu0 %734
    %736 = vrot.lane.b32.xlu0 %v713, 112
    %v737 = vpop.permute.xlu0 %736
    %738 = vrot.lane.b32.xlu0 %v714, 112
    %v739 = vpop.permute.xlu0 %738
    %740 = vrot.lane.b32.xlu0 %v715, 112
    %v741 = vpop.permute.xlu0 %740
    %742 = vrot.lane.b32.xlu0 %v716, 112
    %v743 = vpop.permute.xlu0 %742
    %744 = vrot.lane.b32.xlu0 %v717, 112
    %v745 = vpop.permute.xlu0 %744
    %746 = vrot.lane.b32.xlu0 %v718, 112
    %v747 = vpop.permute.xlu0 %746
    %748 = vrot.lane.b32.xlu0 %v719, 112
    %v749 = vpop.permute.xlu0 %748
    %750 = vrot.lane.b32.xlu0 %v720, 112
    %v751 = vpop.permute.xlu0 %750
    %752 = vrot.lane.b32.xlu0 %v721, 112
    %v753 = vpop.permute.xlu0 %752
    %754 = vrot.lane.b32.xlu0 %v722, 112
    %v755 = vpop.permute.xlu0 %754
    %756 = vrot.lane.b32.xlu0 %v723, 112
    %v757 = vpop.permute.xlu0 %756
    %vm758 = vcmp.le.s32.totalorder %v725, %v11
    %v759 = vsel %vm758, 1, 0
    %v760 = vlaneseq
    %v761 = vshrl.u32 %v760, 7
    %v762 = vsub.s32 0, %v761
    %v763 = vrot.slane %v759, %v762
    %vm764 = vcmp.eq.s32.totalorder %v763, 1
    %v765 = vsel %vm764, %v727, inf
    %v766 = vsel %vm764, %v729, inf
    %v767 = vsel %vm764, %v731, inf
    %v768 = vsel %vm764, %v733, inf
    %v769 = vsel %vm764, %v735, inf
    %v770 = vsel %vm764, %v737, inf
    %v771 = vsel %vm764, %v739, inf
    %v772 = vsel %vm764, %v741, inf
    %v773 = vsel %vm764, %v743, inf
    %v774 = vsel %vm764, %v745, inf
    %v775 = vsel %vm764, %v747, inf
    %v776 = vsel %vm764, %v749, inf
    %v777 = vsel %vm764, %v751, inf
    %v778 = vsel %vm764, %v753, inf
    %v779 = vsel %vm764, %v755, inf
    %v780 = vsel %vm764, %v757, inf
    %v781 = vmin.f32 %v708, %v765
    %v782 = vmin.f32 %v709, %v766
    %v783 = vmin.f32 %v710, %v767
    %v784 = vmin.f32 %v711, %v768
    %v785 = vmin.f32 %v712, %v769
    %v786 = vmin.f32 %v713, %v770
    %v787 = vmin.f32 %v714, %v771
    %v788 = vmin.f32 %v715, %v772
    %v789 = vmin.f32 %v716, %v773
    %v790 = vmin.f32 %v717, %v774
    %v791 = vmin.f32 %v718, %v775
    %v792 = vmin.f32 %v719, %v776
    %v793 = vmin.f32 %v720, %v777
    %v794 = vmin.f32 %v721, %v778
    %v795 = vmin.f32 %v722, %v779
    %v796 = vmin.f32 %v723, %v780
    %797 = vrot.lane.b32.xlu0 %v11, 32
    %v798 = vpop.permute.xlu0 %797
    %799 = vrot.lane.b32.xlu0 %v781, 32
    %v800 = vpop.permute.xlu0 %799
    %801 = vrot.lane.b32.xlu0 %v782, 32
    %v802 = vpop.permute.xlu0 %801
    %803 = vrot.lane.b32.xlu0 %v783, 32
    %v804 = vpop.permute.xlu0 %803
    %805 = vrot.lane.b32.xlu0 %v784, 32
    %v806 = vpop.permute.xlu0 %805
    %807 = vrot.lane.b32.xlu0 %v785, 32
    %v808 = vpop.permute.xlu0 %807
    %809 = vrot.lane.b32.xlu0 %v786, 32
    %v810 = vpop.permute.xlu0 %809
    %811 = vrot.lane.b32.xlu0 %v787, 32
    %v812 = vpop.permute.xlu0 %811
    %813 = vrot.lane.b32.xlu0 %v788, 32
    %v814 = vpop.permute.xlu0 %813
    %815 = vrot.lane.b32.xlu0 %v789, 32
    %v816 = vpop.permute.xlu0 %815
    %817 = vrot.lane.b32.xlu0 %v790, 32
    %v818 = vpop.permute.xlu0 %817
    %819 = vrot.lane.b32.xlu0 %v791, 32
    %v820 = vpop.permute.xlu0 %819
    %821 = vrot.lane.b32.xlu0 %v792, 32
    %v822 = vpop.permute.xlu0 %821
    %823 = vrot.lane.b32.xlu0 %v793, 32
    %v824 = vpop.permute.xlu0 %823
    %825 = vrot.lane.b32.xlu0 %v794, 32
    %v826 = vpop.permute.xlu0 %825
    %827 = vrot.lane.b32.xlu0 %v795, 32
    %v828 = vpop.permute.xlu0 %827
    %829 = vrot.lane.b32.xlu0 %v796, 32
    %v830 = vpop.permute.xlu0 %829
    %vm831 = vcmp.le.s32.totalorder %v798, %v11
    %v832 = vsel %vm831, 1, 0
    %v833 = vlaneseq
    %v834 = vshrl.u32 %v833, 7
    %v835 = vsub.s32 0, %v834
    %v836 = vrot.slane %v832, %v835
    %vm837 = vcmp.eq.s32.totalorder %v836, 1
    %v838 = vsel %vm837, %v800, inf
    %v839 = vsel %vm837, %v802, inf
    %v840 = vsel %vm837, %v804, inf
    %v841 = vsel %vm837, %v806, inf
    %v842 = vsel %vm837, %v808, inf
    %v843 = vsel %vm837, %v810, inf
    %v844 = vsel %vm837, %v812, inf
    %v845 = vsel %vm837, %v814, inf
    %v846 = vsel %vm837, %v816, inf
    %v847 = vsel %vm837, %v818, inf
    %v848 = vsel %vm837, %v820, inf
    %v849 = vsel %vm837, %v822, inf
    %v850 = vsel %vm837, %v824, inf
    %v851 = vsel %vm837, %v826, inf
    %v852 = vsel %vm837, %v828, inf
    %v853 = vsel %vm837, %v830, inf
    %v854 = vmin.f32 %v781, %v838
    %v855 = vmin.f32 %v782, %v839
    %v856 = vmin.f32 %v783, %v840
    %v857 = vmin.f32 %v784, %v841
    %v858 = vmin.f32 %v785, %v842
    %v859 = vmin.f32 %v786, %v843
    %v860 = vmin.f32 %v787, %v844
    %v861 = vmin.f32 %v788, %v845
    %v862 = vmin.f32 %v789, %v846
    %v863 = vmin.f32 %v790, %v847
    %v864 = vmin.f32 %v791, %v848
    %v865 = vmin.f32 %v792, %v849
    %v866 = vmin.f32 %v793, %v850
    %v867 = vmin.f32 %v794, %v851
    %v868 = vmin.f32 %v795, %v852
    %v869 = vmin.f32 %v796, %v853
    %870 = vrot.lane.b32.xlu0 %v11, 96
    %v871 = vpop.permute.xlu0 %870
    %872 = vrot.lane.b32.xlu0 %v854, 96
    %v873 = vpop.permute.xlu0 %872
    %874 = vrot.lane.b32.xlu0 %v855, 96
    %v875 = vpop.permute.xlu0 %874
    %876 = vrot.lane.b32.xlu0 %v856, 96
    %v877 = vpop.permute.xlu0 %876
    %878 = vrot.lane.b32.xlu0 %v857, 96
    %v879 = vpop.permute.xlu0 %878
    %880 = vrot.lane.b32.xlu0 %v858, 96
    %v881 = vpop.permute.xlu0 %880
    %882 = vrot.lane.b32.xlu0 %v859, 96
    %v883 = vpop.permute.xlu0 %882
    %884 = vrot.lane.b32.xlu0 %v860, 96
    %v885 = vpop.permute.xlu0 %884
    %886 = vrot.lane.b32.xlu0 %v861, 96
    %v887 = vpop.permute.xlu0 %886
    %888 = vrot.lane.b32.xlu0 %v862, 96
    %v889 = vpop.permute.xlu0 %888
    %890 = vrot.lane.b32.xlu0 %v863, 96
    %v891 = vpop.permute.xlu0 %890
    %892 = vrot.lane.b32.xlu0 %v864, 96
    %v893 = vpop.permute.xlu0 %892
    %894 = vrot.lane.b32.xlu0 %v865, 96
    %v895 = vpop.permute.xlu0 %894
    %896 = vrot.lane.b32.xlu0 %v866, 96
    %v897 = vpop.permute.xlu0 %896
    %898 = vrot.lane.b32.xlu0 %v867, 96
    %v899 = vpop.permute.xlu0 %898
    %900 = vrot.lane.b32.xlu0 %v868, 96
    %v901 = vpop.permute.xlu0 %900
    %902 = vrot.lane.b32.xlu0 %v869, 96
    %v903 = vpop.permute.xlu0 %902
    %vm904 = vcmp.le.s32.totalorder %v871, %v11
    %v905 = vsel %vm904, 1, 0
    %v906 = vlaneseq
    %v907 = vshrl.u32 %v906, 7
    %v908 = vsub.s32 0, %v907
    %v909 = vrot.slane %v905, %v908
    %vm910 = vcmp.eq.s32.totalorder %v909, 1
    %v911 = vsel %vm910, %v873, inf
    %v912 = vsel %vm910, %v875, inf
    %v913 = vsel %vm910, %v877, inf
    %v914 = vsel %vm910, %v879, inf
    %v915 = vsel %vm910, %v881, inf
    %v916 = vsel %vm910, %v883, inf
    %v917 = vsel %vm910, %v885, inf
    %v918 = vsel %vm910, %v887, inf
    %v919 = vsel %vm910, %v889, inf
    %v920 = vsel %vm910, %v891, inf
    %v921 = vsel %vm910, %v893, inf
    %v922 = vsel %vm910, %v895, inf
    %v923 = vsel %vm910, %v897, inf
    %v924 = vsel %vm910, %v899, inf
    %v925 = vsel %vm910, %v901, inf
    %v926 = vsel %vm910, %v903, inf
    %v927 = vmin.f32 %v854, %v911
    %v928 = vmin.f32 %v855, %v912
    %v929 = vmin.f32 %v856, %v913
    %v930 = vmin.f32 %v857, %v914
    %v931 = vmin.f32 %v858, %v915
    %v932 = vmin.f32 %v859, %v916
    %v933 = vmin.f32 %v860, %v917
    %v934 = vmin.f32 %v861, %v918
    %v935 = vmin.f32 %v862, %v919
    %v936 = vmin.f32 %v863, %v920
    %v937 = vmin.f32 %v864, %v921
    %v938 = vmin.f32 %v865, %v922
    %v939 = vmin.f32 %v866, %v923
    %v940 = vmin.f32 %v867, %v924
    %v941 = vmin.f32 %v868, %v925
    %v942 = vmin.f32 %v869, %v926
    %943 = vrot.lane.b32.xlu0 %v11, 64
    %v944 = vpop.permute.xlu0 %943
    %945 = vrot.lane.b32.xlu0 %v927, 64
    %v946 = vpop.permute.xlu0 %945
    %947 = vrot.lane.b32.xlu0 %v928, 64
    %v948 = vpop.permute.xlu0 %947
    %949 = vrot.lane.b32.xlu0 %v929, 64
    %v950 = vpop.permute.xlu0 %949
    %951 = vrot.lane.b32.xlu0 %v930, 64
    %v952 = vpop.permute.xlu0 %951
    %953 = vrot.lane.b32.xlu0 %v931, 64
    %v954 = vpop.permute.xlu0 %953
    %955 = vrot.lane.b32.xlu0 %v932, 64
    %v956 = vpop.permute.xlu0 %955
    %957 = vrot.lane.b32.xlu0 %v933, 64
    %v958 = vpop.permute.xlu0 %957
    %959 = vrot.lane.b32.xlu0 %v934, 64
    %v960 = vpop.permute.xlu0 %959
    %961 = vrot.lane.b32.xlu0 %v935, 64
    %v962 = vpop.permute.xlu0 %961
    %963 = vrot.lane.b32.xlu0 %v936, 64
    %v964 = vpop.permute.xlu0 %963
    %965 = vrot.lane.b32.xlu0 %v937, 64
    %v966 = vpop.permute.xlu0 %965
    %967 = vrot.lane.b32.xlu0 %v938, 64
    %v968 = vpop.permute.xlu0 %967
    %969 = vrot.lane.b32.xlu0 %v939, 64
    %v970 = vpop.permute.xlu0 %969
    %971 = vrot.lane.b32.xlu0 %v940, 64
    %v972 = vpop.permute.xlu0 %971
    %973 = vrot.lane.b32.xlu0 %v941, 64
    %v974 = vpop.permute.xlu0 %973
    %975 = vrot.lane.b32.xlu0 %v942, 64
    %v976 = vpop.permute.xlu0 %975
    %vm977 = vcmp.le.s32.totalorder %v944, %v11
    %v978 = vsel %vm977, 1, 0
    %v979 = vlaneseq
    %v980 = vshrl.u32 %v979, 7
    %v981 = vsub.s32 0, %v980
    %v982 = vrot.slane %v978, %v981
    %vm983 = vcmp.eq.s32.totalorder %v982, 1
    %v984 = vsel %vm983, %v946, inf
    %v985 = vsel %vm983, %v948, inf
    %v986 = vsel %vm983, %v950, inf
    %v987 = vsel %vm983, %v952, inf
    %v988 = vsel %vm983, %v954, inf
    %v989 = vsel %vm983, %v956, inf
    %v990 = vsel %vm983, %v958, inf
    %v991 = vsel %vm983, %v960, inf
    %v992 = vsel %vm983, %v962, inf
    %v993 = vsel %vm983, %v964, inf
    %v994 = vsel %vm983, %v966, inf
    %v995 = vsel %vm983, %v968, inf
    %v996 = vsel %vm983, %v970, inf
    %v997 = vsel %vm983, %v972, inf
    %v998 = vsel %vm983, %v974, inf
    %v999 = vsel %vm983, %v976, inf
    %v1000 = vmin.f32 %v927, %v984
    %v1001 = vmin.f32 %v928, %v985
    %v1002 = vmin.f32 %v929, %v986
    %v1003 = vmin.f32 %v930, %v987
    %v1004 = vmin.f32 %v931, %v988
    %v1005 = vmin.f32 %v932, %v989
    %v1006 = vmin.f32 %v933, %v990
    %v1007 = vmin.f32 %v934, %v991
    %v1008 = vmin.f32 %v935, %v992
    %v1009 = vmin.f32 %v936, %v993
    %v1010 = vmin.f32 %v937, %v994
    %v1011 = vmin.f32 %v938, %v995
    %v1012 = vmin.f32 %v939, %v996
    %v1013 = vmin.f32 %v940, %v997
    %v1014 = vmin.f32 %v941, %v998
    %v1015 = vmin.f32 %v942, %v999
    %1016 = vxpose.xlu0.b32.start [1/16] %v1000, 128
    %1017 = vxpose.xlu0.b32.cont [2/16] %v1001, 128
    %1018 = vxpose.xlu0.b32.cont [3/16] %v1002, 128
    %1019 = vxpose.xlu0.b32.cont [4/16] %v1003, 128
    %1020 = vxpose.xlu0.b32.cont [5/16] %v1004, 128
    %1021 = vxpose.xlu0.b32.cont [6/16] %v1005, 128
    %1022 = vxpose.xlu0.b32.cont [7/16] %v1006, 128
    %1023 = vxpose.xlu0.b32.cont [8/16] %v1007, 128
    %1024 = vxpose.xlu0.b32.cont [9/16] %v1008, 128
    %1025 = vxpose.xlu0.b32.cont [10/16] %v1009, 128
    %1026 = vxpose.xlu0.b32.cont [11/16] %v1010, 128
    %1027 = vxpose.xlu0.b32.cont [12/16] %v1011, 128
    %1028 = vxpose.xlu0.b32.cont [13/16] %v1012, 128
    %1029 = vxpose.xlu0.b32.cont [14/16] %v1013, 128
    %1030 = vxpose.xlu0.b32.cont [15/16] %v1014, 128
    %1031 = vxpose.xlu0.b32.end [16/16] %v1015, 128
    %v1032 = vpop.trf.xlu0
    %v1033 = vpop.trf.xlu0
    %v1034 = vpop.trf.xlu0
    %v1035 = vpop.trf.xlu0
    %v1036 = vpop.trf.xlu0
    %v1037 = vpop.trf.xlu0
    %v1038 = vpop.trf.xlu0
    %v1039 = vpop.trf.xlu0
    %v1040 = vpop.trf.xlu0
    %v1041 = vpop.trf.xlu0
    %v1042 = vpop.trf.xlu0
    %v1043 = vpop.trf.xlu0
    %v1044 = vpop.trf.xlu0
    %v1045 = vpop.trf.xlu0
    %v1046 = vpop.trf.xlu0
    %v1047 = vpop.trf.xlu0
    %v1048 = vmin.f32 %v1000, %v1032
    %v1049 = vmin.f32 %v1001, %v1033
    %v1050 = vmin.f32 %v1002, %v1034
    %v1051 = vmin.f32 %v1003, %v1035
    %v1052 = vmin.f32 %v1004, %v1036
    %v1053 = vmin.f32 %v1005, %v1037
    %v1054 = vmin.f32 %v1006, %v1038
    %v1055 = vmin.f32 %v1007, %v1039
    %v1056 = vmin.f32 %v1008, %v1040
    %v1057 = vmin.f32 %v1009, %v1041
    %v1058 = vmin.f32 %v1010, %v1042
    %v1059 = vmin.f32 %v1011, %v1043
    %v1060 = vmin.f32 %v1012, %v1044
    %v1061 = vmin.f32 %v1013, %v1045
    %v1062 = vmin.f32 %v1014, %v1046
    %v1063 = vmin.f32 %v1015, %v1047
    %1064 = vxpose.xlu0.b32.start [1/16] %v49, 128
    %1065 = vxpose.xlu0.b32.cont [2/16] %v49, 128
    %1066 = vxpose.xlu0.b32.cont [3/16] %v49, 128
    %1067 = vxpose.xlu0.b32.cont [4/16] %v49, 128
    %1068 = vxpose.xlu0.b32.cont [5/16] %v49, 128
    %1069 = vxpose.xlu0.b32.cont [6/16] %v49, 128
    %1070 = vxpose.xlu0.b32.cont [7/16] %v49, 128
    %1071 = vxpose.xlu0.b32.cont [8/16] %v49, 128
    %1072 = vxpose.xlu0.b32.cont [9/16] %v49, 128
    %1073 = vxpose.xlu0.b32.cont [10/16] %v49, 128
    %1074 = vxpose.xlu0.b32.cont [11/16] %v49, 128
    %1075 = vxpose.xlu0.b32.cont [12/16] %v49, 128
    %1076 = vxpose.xlu0.b32.cont [13/16] %v49, 128
    %1077 = vxpose.xlu0.b32.cont [14/16] %v49, 128
    %1078 = vxpose.xlu0.b32.cont [15/16] %v49, 128
    %1079 = vxpose.xlu0.b32.end [16/16] %v49, 128
    %v1080 = vpop.trf.xlu0
    %v1081 = vpop.trf.xlu0
    %v1082 = vpop.trf.xlu0
    %v1083 = vpop.trf.xlu0
    %v1084 = vpop.trf.xlu0
    %v1085 = vpop.trf.xlu0
    %v1086 = vpop.trf.xlu0
    %v1087 = vpop.trf.xlu0
    %v1088 = vpop.trf.xlu0
    %v1089 = vpop.trf.xlu0
    %v1090 = vpop.trf.xlu0
    %v1091 = vpop.trf.xlu0
    %v1092 = vpop.trf.xlu0
    %v1093 = vpop.trf.xlu0
    %v1094 = vpop.trf.xlu0
    %v1095 = vpop.trf.xlu0
    %vm1096 = vcmp.gt.f32.partialorder %v1080, %v49
    %vm1097 = vcmp.gt.f32.partialorder %v1081, %v49
    %vm1098 = vcmp.gt.f32.partialorder %v1082, %v49
    %vm1099 = vcmp.gt.f32.partialorder %v1083, %v49
    %vm1100 = vcmp.gt.f32.partialorder %v1084, %v49
    %vm1101 = vcmp.gt.f32.partialorder %v1085, %v49
    %vm1102 = vcmp.gt.f32.partialorder %v1086, %v49
    %vm1103 = vcmp.gt.f32.partialorder %v1087, %v49
    %vm1104 = vcmp.gt.f32.partialorder %v1088, %v49
    %vm1105 = vcmp.gt.f32.partialorder %v1089, %v49
    %vm1106 = vcmp.gt.f32.partialorder %v1090, %v49
    %vm1107 = vcmp.gt.f32.partialorder %v1091, %v49
    %vm1108 = vcmp.gt.f32.partialorder %v1092, %v49
    %vm1109 = vcmp.gt.f32.partialorder %v1093, %v49
    %vm1110 = vcmp.gt.f32.partialorder %v1094, %v49
    %vm1111 = vcmp.gt.f32.partialorder %v1095, %v49
    %v1112 = vsel %vm1096, %v1048, -inf
    %v1113 = vsel %vm1097, %v1049, -inf
    %v1114 = vsel %vm1098, %v1050, -inf
    %v1115 = vsel %vm1099, %v1051, -inf
    %v1116 = vsel %vm1100, %v1052, -inf
    %v1117 = vsel %vm1101, %v1053, -inf
    %v1118 = vsel %vm1102, %v1054, -inf
    %v1119 = vsel %vm1103, %v1055, -inf
    %v1120 = vsel %vm1104, %v1056, -inf
    %v1121 = vsel %vm1105, %v1057, -inf
    %v1122 = vsel %vm1106, %v1058, -inf
    %v1123 = vsel %vm1107, %v1059, -inf
    %v1124 = vsel %vm1108, %v1060, -inf
    %v1125 = vsel %vm1109, %v1061, -inf
    %v1126 = vsel %vm1110, %v1062, -inf
    %v1127 = vsel %vm1111, %v1063, -inf
    %v1128 = vmax.f32 %v1112, %v1116
    %v1129 = vmax.f32 %v1113, %v1117
    %v1130 = vmax.f32 %v1114, %v1118
    %v1131 = vmax.f32 %v1115, %v1119
    %v1132 = vmax.f32 %v1128, %v1120
    %v1133 = vmax.f32 %v1129, %v1121
    %v1134 = vmax.f32 %v1130, %v1122
    %v1135 = vmax.f32 %v1131, %v1123
    %v1136 = vmax.f32 %v1132, %v1124
    %v1137 = vmax.f32 %v1133, %v1125
    %v1138 = vmax.f32 %v1134, %v1126
    %v1139 = vmax.f32 %v1135, %v1127
    %v1140 = vmax.f32 %v1136, %v1137
    %v1141 = vmax.f32 %v1138, %v1139
    %v1142 = vmax.f32 %v1140, %v1141
    %v1143 = vrot.slane %v1142, 4
    %v1144 = vmax.f32 %v1142, %v1143
    %v1145 = vrot.slane %v1144, 2
    %v1146 = vmax.f32 %v1144, %v1145
    %v1147 = vrot.slane %v1146, 1
    %v1148 = vmax.f32 %v1146, %v1147
    %vm1149 = vcmp.lt.s32.totalorder %v11, 100
    %vm1150 = vcmp.gt.f32.partialorder %v1148, -inf
    %vm1151 = vmand %vm1149, %vm1150
    %v1152 = vsub.f32 %v9, %v1148
    %v1153 = vsel %vm1151, %v1152, 0.0
    %vm1154 = vcmask 1040384
    %v1155 = vsel %vm1154, %v1153, 0.0
    %1156 = vadd.xlane.f32.xlu0 %v1155
    %v1157 = vpop.xlane.xlu0 %1156
    %v1158 = vsel %vm1154, %v1153, -inf
    %1159 = vmax.xlane.f32.xlu0 %v1158
    %v1160 = vpop.xlane.xlu0 %1159
    %vm1161 = vcmp.ge.f32.partialorder %v1153, %v1160
    %v1162 = vsel %vm1161, 1.0, 0.0
    %v1163 = vsel %vm1154, %v1162, 0.0
    %1164 = vadd.xlane.f32.xlu0 %v1163
    %v1165 = vpop.xlane.xlu0 %1164
    %vm1166 = vcmp.lt.f32.partialorder %v1153, %v1160
    %v1167 = vsel %vm1166, %v1153, -inf
    %v1168 = vsel %vm1154, %v1167, -inf
    %1169 = vmax.xlane.f32.xlu0 %v1168
    %v1170 = vpop.xlane.xlu0 %1169
    %vm1171 = vcmp.ge.f32.partialorder %v1165, 2.0
    %v1172 = vsel %vm1171, %v1160, %v1170
    %v1173 = vsub.f32 %v1157, %v1160
    %v1174 = vsub.f32 %v1173, %v1172
    %s1175 = vtos %v1174
    %s1176 = scalar_lea.smem [#allocation2], 0
    %1177 = sst [smem:[%s1176]] %s1175
    // Predicated region
    $region6: #{toploss2.1} parent=1 // pred_check
      _
    $region7: #{toploss2.1} parent=1 // pred_check_branch
      %1179 = sbr.rel (0) target = $region9
    $region8: #{toploss2.1} parent=1 // pred_region
      %s1181 = ssub.s32 16, 16
      %1182 = vsyncadd [#allocation3], %s1181
      %1185 = dma.smem_to_hbm [#allocation2], 16, %s1, [#allocation3]
    $region9: #{toploss2.1} parent=1 // pred_fallthru
      _
    // Predicated region
    $region10: #{toploss2.1} parent=1 // pred_check
      _
    $region11: #{toploss2.1} parent=1 // pred_check_branch
      %1187 = sbr.rel (0) target = $region13
    $region12: #{toploss2.1} parent=1 // pred_region
      %1188 = dma.done [#allocation3], 16
    $region13: #{toploss2.1} parent=1 // pred_fallthru
      _
    %1189 = sfence
    %1190 = vsyncpa [#allocation3], 1

</llo_original>
